<compile_context>
chip_gen: v6e
topology: v6e:2x2x1
jax: 0.10.0
libtpu: 0.0.40
codegen_flags: <defaults>
</compile_context>

<pallas_src>
import functools
import math

import numpy as np

import jax
import jax.numpy as jnp
from jax.experimental import pallas as pl
from jax.experimental.pallas import tpu as pltpu


# ----------------------------------------------------------------------------- weights


def _bilinear_matrix(in_size: int, out_size: int, scale_factor: float) -> np.ndarray:
    """1-D bilinear (align_corners=False) interpolation matrix, PyTorch semantics."""
    dst = np.arange(out_size, dtype=np.float32)
    src = (dst + 0.5) * np.float32(1.0 / float(scale_factor)) - np.float32(0.5)
    src = np.maximum(src, 0.0)                       # PyTorch clamps negative src to 0
    i0 = np.clip(np.floor(src).astype(np.int32), 0, in_size - 1)
    i1 = np.minimum(i0 + 1, in_size - 1)
    w1 = (src - i0).astype(np.float32)
    w0 = np.float32(1.0) - w1
    m = np.zeros((out_size, in_size), dtype=np.float32)
    rows = np.arange(out_size)
    m[rows, i0] += w0
    m[rows, i1] += w1                                # i0 == i1 at the clamped edge -> sums to 1
    return m                                         # (out_size, in_size)


@functools.lru_cache(maxsize=None)
def _interp_weights(H, W, H_out, W_out, scale_factor, x_dtype_name):
    """Device copies of the interpolation matrices, cached per layer config.

    bf16 inputs get bf16 matrices when that is exact (power-of-two scale
    factors) so the MXU runs native single-pass bf16; otherwise f32.
    """
    wh = _bilinear_matrix(H, H_out, scale_factor)                    # (H_out, H)
    wwt = np.ascontiguousarray(_bilinear_matrix(W, W_out, scale_factor).T)  # (W, W_out)
    wdtype = np.float32
    if x_dtype_name == "bfloat16":
        bf = jnp.bfloat16
        exact = (np.array_equal(wh.astype(bf).astype(np.float32), wh)
                 and np.array_equal(wwt.astype(bf).astype(np.float32), wwt))
        if exact:
            wdtype = bf
    return jnp.asarray(wh, dtype=wdtype), jnp.asarray(wwt, dtype=wdtype)


# ----------------------------------------------------------------------------- kernel


def _pick_unroll(h, h_out, tw):
    """Unroll the per-image loop enough to hide MXU latency on small images,
    but keep the pool of live f32 temporaries a minor VMEM term on big ones."""
    return 2 if (h + h_out) * tw * 4 > 512 * 1024 else 8


def _upsample_kernel(wh_ref, wwt_ref, x_ref, o_ref):
    """One block: `tc` images, full (H, W) in, (H_out, tw) out per image.

    Per-image loop of two plain 2-D MXU matmuls (W-interp then H-interp):
    no reshapes, no transposes and no (tc, H_out, H) broadcast of WH, so the
    only f32 temporaries are the small per-iteration (H, tw)/(H_out, tw) tiles.
    Ragged last NC block: rows past NC compute garbage that the masked
    writeback discards (rows are independent, no cross-contamination).
    """
    tc, h, w = x_ref.shape
    h_out = wh_ref.shape[0]
    tw = wwt_ref.shape[1]
    f32 = jnp.float32
    bf16_weights = jnp.dtype(wh_ref.dtype) != jnp.dtype(f32)

    def body(c, carry):
        # W interpolation: (h, w) @ (w, tw), native input dtype, f32 accumulate.
        t = jnp.dot(x_ref[c], wwt_ref[...], preferred_element_type=f32)
        if bf16_weights:
            t = t.astype(wh_ref.dtype)        # keep the 2nd matmul on the bf16 MXU
        # H interpolation: (h_out, h) @ (h, tw), f32 accumulate.
        o = jnp.dot(wh_ref[...], t, preferred_element_type=f32)
        o_ref[c] = o.astype(o_ref.dtype)
        return carry

    unroll = max(1, min(tc, _pick_unroll(h, h_out, tw)))
    jax.lax.fori_loop(0, tc, body, 0, unroll=unroll)


# ----------------------------------------------------------------------------- sizing


def _vmem_limits():
    """Per-generation VMEM sizing (v5e/v6e: 128 MiB phys, v7x: 64 MiB phys)."""
    try:
        phys = int(pltpu.get_tpu_info().vmem_capacity_bytes)
    except Exception:
        phys = 64 * 1024 * 1024                       # conservative (v7x) fallback
    vmem_limit = min(int(phys * 0.70), 96 * 1024 * 1024)
    tile_budget = int(vmem_limit * 0.75)              # headroom for compiler scratch
    return vmem_limit, tile_budget


def _select_tiles(NC, H, W, H_out, W_out, x_itemsize, w_itemsize, budget):
    """Pick (tw, tc, n_j): lane-dense W_out tile and images-per-block.

    No divisor requirement on NC (the grid is cdiv(NC, tc) with a ragged,
    masked last block).  tw is only tiled (multiples of 128) when needed to fit
    the budget with tc >= 2 -- the extra full-W input re-reads are cheap at
    sf=2 because the input is 1/4 of the output.
    """
    cands = [W_out]
    if W_out % 128 == 0:
        t = W_out // 2
        while t >= 128:
            t = (t // 128) * 128
            if t not in cands:
                cands.append(t)
            t //= 2

    def fit_tc(tw):
        n_j = pl.cdiv(W_out, tw)
        # wh is always single-buffered (constant index map); wwt only when untiled.
        fixed = H_out * H * w_itemsize
        fixed += W * tw * w_itemsize * (1 if n_j == 1 else 2)
        # live f32 temporaries of the (unrolled) per-image loop
        unroll = _pick_unroll(H, H_out, tw)
        fixed += (unroll + 1) * 4 * (H + H_out) * tw
        # double-buffered input / output blocks
        per_img = 2 * H * W * x_itemsize + 2 * H_out * tw * x_itemsize
        return int(max(0, (budget - fixed) // per_img)), n_j

    tw = tc = n_j = None
    for cand in cands:                       # largest tile first: fewest x re-reads
        c_tc, c_nj = fit_tc(cand)
        if c_tc >= min(NC, 2):
            tw, tc, n_j = cand, c_tc, c_nj
            break
    if tw is None:
        # Nothing fits with tc >= 2: take whatever maximizes tc (at least 1).
        tw = max(cands, key=lambda c: fit_tc(c)[0])
        tc, n_j = fit_tc(tw)
        tc = max(1, tc)
    tc = min(tc, NC)
    # Keep the grid at >= 4 steps when NC allows: prefetch/writeback overlap and
    # an even megacore split instead of one giant step.
    need_i = pl.cdiv(4, n_j)
    if need_i > 1 and NC > 1:
        tc = min(tc, max(1, (NC - 1) // (need_i - 1)))
    return tw, tc, n_j


def _weight_spec(block_shape, index_map, single_buffer):
    """Constant-index weight operands do not need the 2nd pipeline buffer."""
    if single_buffer:
        try:
            return pl.BlockSpec(block_shape, index_map, pipeline_mode=pl.Buffered(1))
        except TypeError:                    # older jax without pipeline_mode
            pass
    return pl.BlockSpec(block_shape, index_map)


# ----------------------------------------------------------------------------- wrapper


def upsample_bilinear(x: jnp.ndarray, scale_factor: float) -> jnp.ndarray:
    """x: (N, C, H, W) -> (N, C, floor(H*sf), floor(W*sf)), bilinear, align_corners=False."""
    N, C, H, W = x.shape
    H_out = int(math.floor(H * float(scale_factor)))
    W_out = int(math.floor(W * float(scale_factor)))
    NC = N * C

    wh, wwt = _interp_weights(H, W, H_out, W_out, float(scale_factor),
                              jnp.dtype(x.dtype).name)
    x_itemsize = jnp.dtype(x.dtype).itemsize
    w_itemsize = jnp.dtype(wh.dtype).itemsize

    vmem_limit, tile_budget = _vmem_limits()
    tw, tc, n_j = _select_tiles(NC, H, W, H_out, W_out,
                                x_itemsize, w_itemsize, tile_budget)
    n_i = pl.cdiv(NC, tc)

    x_nc = x.reshape(NC, H, W)                                 # free HBM view
    flops = 2 * NC * (H * W * W_out + H_out * H * W_out)
    bytes_accessed = (NC * H * W * x_itemsize * n_j            # x re-read per W_out tile
                      + NC * H_out * W_out * x_itemsize
                      + (H_out * H + W * W_out) * w_itemsize)

    out_nc = pl.pallas_call(
        _upsample_kernel,
        out_shape=jax.ShapeDtypeStruct((NC, H_out, W_out), x.dtype),
        grid_spec=pltpu.PrefetchScalarGridSpec(
            num_scalar_prefetch=0,
            grid=(n_i, n_j),                 # j innermost: x block revisited, not re-DMA'd
            in_specs=[
                _weight_spec((H_out, H), lambda i, j: (0, 0), single_buffer=True),
                _weight_spec((W, tw), lambda i, j: (0, j), single_buffer=(n_j == 1)),
                pl.BlockSpec((tc, H, W), lambda i, j: (i, 0, 0)),
            ],
            out_specs=pl.BlockSpec((tc, H_out, tw), lambda i, j: (i, 0, j)),
        ),
        compiler_params=pltpu.CompilerParams(
            dimension_semantics=("parallel", "parallel"),
            vmem_limit_bytes=vmem_limit),
        cost_estimate=pl.CostEstimate(flops=flops, transcendentals=0,
                                      bytes_accessed=bytes_accessed),
    )(wh, wwt, x_nc)
    return out_nc.reshape(N, C, H_out, W_out)


# ----------------------------------------------------------------------------- test


if __name__ == "__main__":
    def reference(x, sf):
        n, c, h, w = x.shape
        wh = jnp.asarray(_bilinear_matrix(h, int(math.floor(h * float(sf))), sf))
        ww = jnp.asarray(_bilinear_matrix(w, int(math.floor(w * float(sf))), sf))
        return jnp.einsum("oh,nchw,pw->ncop", wh, x.astype(jnp.float32), ww)

    key = jax.random.PRNGKey(0)
    k1, k2, k3 = jax.random.split(key, 3)
    sf = 2

    # Case 1: small spatial maps (16 -> 32); W_out < 128 exercises the
    # masked-store branch of the separable kernel (kron path removed).
    x1 = jax.random.normal(k1, (2, 4, 16, 16), dtype=jnp.float32)
    out1 = jax.block_until_ready(upsample_bilinear(x1, sf))
    assert out1.shape == (2, 4, 32, 32), out1.shape
    assert jnp.allclose(out1, reference(x1, sf), atol=1e-5, rtol=1e-5)

    # Case 2: W_out a multiple of 128 -> lane-dense stores (the layout taken for
    # real fastMRI 320 -> 640 feature maps).
    x2 = jax.random.normal(k2, (2, 2, 64, 64), dtype=jnp.float32)
    out2 = jax.block_until_ready(upsample_bilinear(x2, sf))
    assert out2.shape == (2, 2, 128, 128), out2.shape
    assert jnp.allclose(out2, reference(x2, sf), atol=1e-5, rtol=1e-5)

    # Case 3: bf16 input -> exact bf16 interpolation weights, native bf16 MXU.
    x3 = jax.random.normal(k3, (2, 4, 32, 32), dtype=jnp.bfloat16)
    out3 = jax.block_until_ready(upsample_bilinear(x3, sf))
    assert out3.shape == (2, 4, 64, 64), out3.shape
    assert out3.dtype == jnp.bfloat16
    assert jnp.allclose(out3.astype(jnp.float32), reference(x3, sf),
                        atol=5e-2, rtol=5e-2)

    print("KERNEL_OK")
</pallas_src>

<mosaic_0001>
module attributes {stable_mosaic.version = 11 : i64} {
  func.func @_upsample_kernel(%arg0: i32, %arg1: i32, %arg2: memref<32x16xf32, #tpu.memory_space<vmem>>, %arg3: memref<16x32xf32, #tpu.memory_space<vmem>>, %arg4: memref<2x16x16xf32, #tpu.memory_space<vmem>>, %arg5: memref<2x32x32xf32, #tpu.memory_space<vmem>>) attributes {dimension_semantics = [#tpu.dimension_semantics<parallel>, #tpu.dimension_semantics<parallel>], iteration_bounds = array<i64: 4, 1>, scalar_prefetch = 0 : i64, scratch_operands = 0 : i64, tpu.core_type = #tpu.core_type<tc>, window_params = [{pipeline_mode = #tpu.pipeline_mode<synchronous>, transform_indices = @transform_0, window_bounds = array<i64: 32, 16>}, {pipeline_mode = #tpu.pipeline_mode<synchronous>, transform_indices = @transform_1, window_bounds = array<i64: 16, 32>}, {transform_indices = @transform_2, window_bounds = array<i64: 2, 16, 16>}, {transform_indices = @transform_3, window_bounds = array<i64: 2, 32, 32>}]} {
    %c0_i32 = arith.constant 0 : i32
    %0 = arith.index_cast %c0_i32 : i32 to index
    %c0 = arith.constant 0 : index
    %c0_0 = arith.constant 0 : index
    %1 = vector.load %arg4[%0, %c0, %c0_0] : memref<2x16x16xf32, #tpu.memory_space<vmem>>, vector<1x16x16xf32>
    %2 = vector.shape_cast %1 : vector<1x16x16xf32> to vector<16x16xf32>
    %c0_1 = arith.constant 0 : index
    %c0_2 = arith.constant 0 : index
    %3 = vector.load %arg3[%c0_1, %c0_2] : memref<16x32xf32, #tpu.memory_space<vmem>>, vector<16x32xf32>
    %cst = arith.constant dense<0.000000e+00> : vector<16x32xf32>
    %4 = tpu.matmul %2, %3, %cst {dimension_numbers = #tpu.dot_dimension_numbers<[1], [0], [0], [1], [0, 0, 1, 1], [], []>} : vector<16x16xf32>, vector<16x32xf32>, vector<16x32xf32> -> vector<16x32xf32>
    %c0_3 = arith.constant 0 : index
    %c0_4 = arith.constant 0 : index
    %5 = vector.load %arg2[%c0_3, %c0_4] : memref<32x16xf32, #tpu.memory_space<vmem>>, vector<32x16xf32>
    %cst_5 = arith.constant dense<0.000000e+00> : vector<32x32xf32>
    %6 = tpu.matmul %5, %4, %cst_5 {dimension_numbers = #tpu.dot_dimension_numbers<[1], [0], [0], [1], [0, 0, 1, 1], [], []>} : vector<32x16xf32>, vector<16x32xf32>, vector<32x32xf32> -> vector<32x32xf32>
    %7 = arith.index_cast %c0_i32 : i32 to index
    %c0_6 = arith.constant 0 : index
    %c0_7 = arith.constant 0 : index
    %8 = vector.load %arg5[%7, %c0_6, %c0_7] : memref<2x32x32xf32, #tpu.memory_space<vmem>>, vector<1x32x32xf32>
    %9 = vector.shape_cast %8 : vector<1x32x32xf32> to vector<32x32xf32>
    %10 = vector.shape_cast %6 : vector<32x32xf32> to vector<1x32x32xf32>
    tpu.vector_store %arg5[%7, %c0_6, %c0_7], %10 {strides = array<i32>} : memref<2x32x32xf32, #tpu.memory_space<vmem>>, vector<1x32x32xf32>,
    %c1_i32 = arith.constant 1 : i32
    %11 = arith.index_cast %c1_i32 : i32 to index
    %c0_8 = arith.constant 0 : index
    %c0_9 = arith.constant 0 : index
    %12 = vector.load %arg4[%11, %c0_8, %c0_9] : memref<2x16x16xf32, #tpu.memory_space<vmem>>, vector<1x16x16xf32>
    %13 = vector.shape_cast %12 : vector<1x16x16xf32> to vector<16x16xf32>
    %c0_10 = arith.constant 0 : index
    %c0_11 = arith.constant 0 : index
    %14 = vector.load %arg3[%c0_10, %c0_11] : memref<16x32xf32, #tpu.memory_space<vmem>>, vector<16x32xf32>
    %cst_12 = arith.constant dense<0.000000e+00> : vector<16x32xf32>
    %15 = tpu.matmul %13, %14, %cst_12 {dimension_numbers = #tpu.dot_dimension_numbers<[1], [0], [0], [1], [0, 0, 1, 1], [], []>} : vector<16x16xf32>, vector<16x32xf32>, vector<16x32xf32> -> vector<16x32xf32>
    %c0_13 = arith.constant 0 : index
    %c0_14 = arith.constant 0 : index
    %16 = vector.load %arg2[%c0_13, %c0_14] : memref<32x16xf32, #tpu.memory_space<vmem>>, vector<32x16xf32>
    %cst_15 = arith.constant dense<0.000000e+00> : vector<32x32xf32>
    %17 = tpu.matmul %16, %15, %cst_15 {dimension_numbers = #tpu.dot_dimension_numbers<[1], [0], [0], [1], [0, 0, 1, 1], [], []>} : vector<32x16xf32>, vector<16x32xf32>, vector<32x32xf32> -> vector<32x32xf32>
    %18 = arith.index_cast %c1_i32 : i32 to index
    %c0_16 = arith.constant 0 : index
    %c0_17 = arith.constant 0 : index
    %19 = vector.load %arg5[%18, %c0_16, %c0_17] : memref<2x32x32xf32, #tpu.memory_space<vmem>>, vector<1x32x32xf32>
    %20 = vector.shape_cast %19 : vector<1x32x32xf32> to vector<32x32xf32>
    %21 = vector.shape_cast %17 : vector<32x32xf32> to vector<1x32x32xf32>
    tpu.vector_store %arg5[%18, %c0_16, %c0_17], %21 {strides = array<i32>} : memref<2x32x32xf32, #tpu.memory_space<vmem>>, vector<1x32x32xf32>,
    %c2_i32 = arith.constant 2 : i32
    return
  }
  func.func @transform_0(%arg0: i32, %arg1: i32) -> (i32, i32) {
    %c0_i32 = arith.constant 0 : i32
    %c0_i32_0 = arith.constant 0 : i32
    %c0_i32_1 = arith.constant 0 : i32
    return %c0_i32, %c0_i32_0 : i32, i32
  }
  func.func @transform_1(%arg0: i32, %arg1: i32) -> (i32, i32) {
    %c0_i32 = arith.constant 0 : i32
    %c0_i32_0 = arith.constant 0 : i32
    return %c0_i32, %arg1 : i32, i32
  }
  func.func @transform_2(%arg0: i32, %arg1: i32) -> (i32, i32, i32) {
    %c0_i32 = arith.constant 0 : i32
    %c0_i32_0 = arith.constant 0 : i32
    %c0_i32_1 = arith.constant 0 : i32
    return %arg0, %c0_i32, %c0_i32_0 : i32, i32, i32
  }
  func.func @transform_3(%arg0: i32, %arg1: i32) -> (i32, i32, i32) {
    %c0_i32 = arith.constant 0 : i32
    %c0_i32_0 = arith.constant 0 : i32
    return %arg0, %c0_i32, %arg1 : i32, i32, i32
  }
}

</mosaic_0001>

<llo_original>
// kernel: tpu_custom_call.1
$region0: #{tpu_custom_call.1}
  #allocation0 [shape = 'u32[]', space=smem, size = 0x4, offset = 0x4, fixed_abs, tag = 'smem constant byte address 0x4 - core index']
  #allocation1 [shape = 'u32[144,128]{1,0:T(1,128)}', space=vmem, size = 0x12000, scoped, tag = 'internal scratch']
  %s0 = inlined_call_operand.vmem [shape: f32[32,16], index: 0, kind: input, shape index: {}]
  %s1 = inlined_call_operand.vmem [shape: f32[16,32], index: 1, kind: input, shape index: {}]
  %s2 = inlined_call_operand.hbm [shape: f32[8,16,16], index: 2, kind: input, shape index: {}]
  %s3 = inlined_call_operand.hbm [shape: f32[8,32,32], index: 3, kind: output, shape index: {}]
  %s4 = sld [smem:[#allocation0]]
  $region49: #{tpu_custom_call.1} parent=0
    _
  %s6 = ssub.s32 1, %s4
  %s7 = scalar_select 0, %s6, %s4
  $region1: #{tpu_custom_call.1} parent=0
    #allocation2 [shape = 'u8[32768]{0}', space=vmem, size = 0x8000, scoped, tag = 'input window, operand 2']
    #allocation3 [shape = 's32[2]{0}', space=sflag, size = 0x8, scoped, tag = 'scoped memory for tpu_custom_call.1']
    #allocation4 [shape = 's32[2]{0}', space=sflag, size = 0x8, scoped, tag = 'scoped memory for tpu_custom_call.1']
    #allocation5 [shape = 'u8[65536]{0}', space=vmem, size = 0x10000, scoped, tag = 'output window, operand 0']
    %8 = vsyncpa [#allocation3], 0
    %s9 = scalar_lea.sflag [#allocation3], 1
    %10 = vsyncpa %s9, 0
    %11 = vsyncpa [#allocation4], 0
    %s12 = scalar_lea.sflag [#allocation4], 1
    %13 = vsyncpa %s12, 0
    loop: start=0, step=1, limit=6
    $region2: #{tpu_custom_call.1} parent=1 // loop_pre_header
      _
    $region3: #{tpu_custom_call.1} parent=1 // loop_header
      %s15 = sphi 0, %s19
      %p16 = scmp.ge.s32.totalorder %s15, 6
      %s22 = sphi 0, %s34
      %s23 = sphi 0, %s30
      %s24 = sphi 0, %s22
      %s25 = sphi 0, %s23
      %s26 = sphi 0, %s24
      %s27 = sphi 0, %s25
      %s35 = sphi 0, %s35
      %s37 = sphi 0, %s35
      %s38 = sphi 0, %s37
      %s52 = sphi 0, %s38
      %s58 = sphi 0, %s60
      %s61 = sphi 0, %s58
      %s62 = sphi 0, %s61
      %s78 = sphi 0, %s62
      %s84 = sphi 0, %s86
      %s87 = sphi 0, %s84
      %s88 = sphi 0, %s87
      %s104 = sphi 0, %s88
      %s112 = sphi 0, %s114
      %s115 = sphi 0, %s112
      %s116 = sphi 0, %s115
      %s132 = sphi 0, %s116
    $region4: #{tpu_custom_call.1} parent=1 // loop_header_branch
      %18 = sbr.rel (%p16) target = $region8
    $region5: #{tpu_custom_call.1} parent=1 // loop_body
      %s20 = ssub.s32 %s15, 1
      %s21 = ssub.s32 %s15, 2
      %s28 = sadd.s32 1, %s23
      %p29 = scmp.ge.s32.totalorder %s28, 1
      %s30 = scalar_select %p29, 0, %s28
      %s31 = sadd.s32 1, %s22
      %s32 = scalar_select %p29, %s31, %s22
      %p33 = scmp.ge.s32.totalorder %s32, 4
      %s34 = scalar_select %p33, 0, %s32
      %s36 = sadd.s32 %s35, 1
      %p39 = scmp.eq.s32.totalorder %s15, 3
      %p40 = scmp.ne.s32.totalorder %s35, %s37
      %p41 = scmp.eq.s32.totalorder %s15, 0
      %p42 = por %p40, %p41
      %p43 = scmp.ne.s32.totalorder %s35, %s37
      %p44 = scmp.eq.s32.totalorder %s20, 3
      %p45 = por %p43, %p44
      %p46 = scmp.ne.s32.totalorder %s37, %s38
      %p47 = scmp.eq.s32.totalorder %s20, 0
      %p48 = por %p46, %p47
      %p49 = scmp.ne.s32.totalorder %s37, %s38
      %p50 = scmp.eq.s32.totalorder %s21, 3
      %p51 = por %p49, %p50
      %p53 = scmp.ne.s32.totalorder %s38, %s52
      %p54 = scmp.eq.s32.totalorder %s21, 0
      %p55 = por %p53, %p54
      %s56 = ssub.s32 %s23, %s30
      %p57 = scmp.eq.s32.totalorder %s56, 0
      %s59 = sadd.s32 %s58, 1
      %s60 = scalar_select %p57, %s58, %s59
      %p63 = pneg %p57
      %p64 = scmp.eq.s32.totalorder %s15, 3
      %p65 = por %p63, %p64
      %p66 = scmp.ne.s32.totalorder %s58, %s61
      %p67 = scmp.eq.s32.totalorder %s15, 0
      %p68 = por %p66, %p67
      %p69 = scmp.ne.s32.totalorder %s58, %s61
      %p70 = scmp.eq.s32.totalorder %s20, 3
      %p71 = por %p69, %p70
      %p72 = scmp.ne.s32.totalorder %s61, %s62
      %p73 = scmp.eq.s32.totalorder %s20, 0
      %p74 = por %p72, %p73
      %p75 = scmp.ne.s32.totalorder %s61, %s62
      %p76 = scmp.eq.s32.totalorder %s21, 3
      %p77 = por %p75, %p76
      %p79 = scmp.ne.s32.totalorder %s62, %s78
      %p80 = scmp.eq.s32.totalorder %s21, 0
      %p81 = por %p79, %p80
      %s82 = ssub.s32 %s22, %s34
      %p83 = scmp.eq.s32.totalorder %s82, 0
      %s85 = sadd.s32 %s84, 1
      %s86 = scalar_select %p83, %s84, %s85
      %p89 = pneg %p83
      %p90 = scmp.eq.s32.totalorder %s15, 3
      %p91 = por %p89, %p90
      %p92 = scmp.ne.s32.totalorder %s84, %s87
      %p93 = scmp.eq.s32.totalorder %s15, 0
      %p94 = por %p92, %p93
      %p95 = scmp.ne.s32.totalorder %s84, %s87
      %p96 = scmp.eq.s32.totalorder %s20, 3
      %p97 = por %p95, %p96
      %p98 = scmp.ne.s32.totalorder %s87, %s88
      %p99 = scmp.eq.s32.totalorder %s20, 0
      %p100 = por %p98, %p99
      %p101 = scmp.ne.s32.totalorder %s87, %s88
      %p102 = scmp.eq.s32.totalorder %s21, 3
      %p103 = por %p101, %p102
      %p105 = scmp.ne.s32.totalorder %s88, %s104
      %p106 = scmp.eq.s32.totalorder %s21, 0
      %p107 = por %p105, %p106
      %s108 = ssub.s32 %s22, %s34
      %s109 = ssub.s32 %s23, %s30
      %s110 = sor.u32 %s108, %s109
      %p111 = scmp.eq.s32.totalorder %s110, 0
      %s113 = sadd.s32 %s112, 1
      %s114 = scalar_select %p111, %s112, %s113
      %p117 = pneg %p111
      %p118 = scmp.eq.s32.totalorder %s15, 3
      %p119 = por %p117, %p118
      %p120 = scmp.ne.s32.totalorder %s112, %s115
      %p121 = scmp.eq.s32.totalorder %s15, 0
      %p122 = por %p120, %p121
      %p123 = scmp.ne.s32.totalorder %s112, %s115
      %p124 = scmp.eq.s32.totalorder %s20, 3
      %p125 = por %p123, %p124
      %p126 = scmp.ne.s32.totalorder %s115, %s116
      %p127 = scmp.eq.s32.totalorder %s20, 0
      %p128 = por %p126, %p127
      %p129 = scmp.ne.s32.totalorder %s115, %s116
      %p130 = scmp.eq.s32.totalorder %s21, 3
      %p131 = por %p129, %p130
      %p133 = scmp.ne.s32.totalorder %s116, %s132
      %p134 = scmp.eq.s32.totalorder %s21, 0
      %p135 = por %p133, %p134
      %p136 = scmp.le.s32.totalorder 1, %s15
      %p137 = scmp.lt.s32.totalorder %s15, 5
      %p138 = pnand %p136, %p137
      %p139 = pneg %p138
      // Predicated region
      $region9: #{tpu_custom_call.1} parent=5 // pred_check
        _
      $region10: #{tpu_custom_call.1} parent=5 // pred_check_branch
        %141 = sbr.rel (%p138) target = $region12
      $region11: #{tpu_custom_call.1} parent=5 // pred_region
        %s142 = ssub.s32 %s15, 1
        // Predicated region
        $region13: #{tpu_custom_call.1} parent=11 // pred_check
          %p143 = pneg %p48
        $region14: #{tpu_custom_call.1} parent=11 // pred_check_branch
          %145 = sbr.rel (%p143) target = $region16
        $region15: #{tpu_custom_call.1} parent=11 // pred_region
          _
        $region16: #{tpu_custom_call.1} parent=11 // pred_fallthru
          _
        // Predicated region
        $region17: #{tpu_custom_call.1} parent=11 // pred_check
          %p146 = pneg %p74
        $region18: #{tpu_custom_call.1} parent=11 // pred_check_branch
          %148 = sbr.rel (%p146) target = $region20
        $region19: #{tpu_custom_call.1} parent=11 // pred_region
          %p149 = scmp.lt.s32.totalorder %s25, 0
          %s150 = scalar_select %p149, %s25, 0
          %s151 = smul.addr %s150, 8
          %s152 = scalar_lea.vmem %s1, %s151
        $region20: #{tpu_custom_call.1} parent=11 // pred_fallthru
          _
      $region12: #{tpu_custom_call.1} parent=5 // pred_fallthru
        _
      %p153 = scmp.lt.s32.totalorder %s15, 4
      // Predicated region
      $region21: #{tpu_custom_call.1} parent=5 // pred_check
        %p154 = pneg %p153
      $region22: #{tpu_custom_call.1} parent=5 // pred_check_branch
        %156 = sbr.rel (%p154) target = $region24
      $region23: #{tpu_custom_call.1} parent=5 // pred_region
        // Predicated region
        $region25: #{tpu_custom_call.1} parent=23 // pred_check
          %p157 = pneg %p94
        $region26: #{tpu_custom_call.1} parent=23 // pred_check_branch
          %159 = sbr.rel (%p157) target = $region28
        $region27: #{tpu_custom_call.1} parent=23 // pred_region
          %s160 = sand.u32 %s84, 1
          %s161 = scalar_lea.sflag [#allocation3], %s160
          %s162 = sand.u32 %s84, 1
          %s163 = smul.addr %s162, 32
          %s164 = scalar_lea.vmem [#allocation2], %s163
          %s165 = smul.u32 2, %s22
          %s167 = ssub.s32 512, 512
          %168 = vsyncadd %s161, %s167
          %s169 = smul.addr %s165, 2
          %s170 = smul.addr %s169, 128
          %s171 = scalar_lea.hbm %s2, %s170
          %s172 = sshll.u32 %s164, 4
          %s173 = int_to_ptr.vmem [resolvable:$true] %s172
          %178 = dma.hbm_to_vmem [thread:$0]  %s171, 512, %s173, %s161, 128, 128, 8
        $region28: #{tpu_custom_call.1} parent=23 // pred_fallthru
          _
      $region24: #{tpu_custom_call.1} parent=5 // pred_fallthru
        _
      %p179 = scmp.le.s32.totalorder 1, %s15
      %p180 = scmp.lt.s32.totalorder %s15, 5
      %p181 = pnand %p179, %p180
      %p182 = pneg %p181
      // Predicated region
      $region29: #{tpu_custom_call.1} parent=5 // pred_check
        _
      $region30: #{tpu_custom_call.1} parent=5 // pred_check_branch
        %184 = sbr.rel (%p181) target = $region32
      $region31: #{tpu_custom_call.1} parent=5 // pred_region
        %s185 = ssub.s32 %s15, 1
        %s186 = sand.u32 %s87, 1
        %s187 = scalar_lea.sflag [#allocation3], %s186
        %s188 = sand.u32 %s87, 1
        %s189 = smul.addr %s188, 32
        %s190 = scalar_lea.vmem [#allocation2], %s189
        // Predicated region
        $region33: #{tpu_custom_call.1} parent=31 // pred_check
          %p191 = pneg %p100
        $region34: #{tpu_custom_call.1} parent=31 // pred_check_branch
          %193 = sbr.rel (%p191) target = $region36
        $region35: #{tpu_custom_call.1} parent=31 // pred_region
          %194 = dma.done %s187, 512
        $region36: #{tpu_custom_call.1} parent=31 // pred_fallthru
          _
        %p195 = pneg %p48
        %p196 = pneg %p45
        %p197 = scmp.lt.s32.totalorder %s25, 0
        %s198 = scalar_select %p197, %s25, 0
        %s199 = smul.addr %s198, 8
        %s200 = scalar_lea.vmem %s1, %s199
        %p201 = pneg %p74
        %p202 = pneg %p71
        %s203 = sand.u32 %s87, 1
        %s204 = scalar_lea.sflag [#allocation3], %s203
        %s205 = sand.u32 %s87, 1
        %s206 = smul.addr %s205, 32
        %s207 = scalar_lea.vmem [#allocation2], %s206
        %p208 = pneg %p100
        %p209 = pneg %p97
        %p210 = pneg %p128
        %p211 = pneg %p125
        %s212 = sand.u32 %s115, 1
        %s213 = scalar_lea.sflag [#allocation4], %s212
        %s214 = sand.u32 %s115, 1
        %s215 = smul.addr %s214, 64
        %s216 = scalar_lea.vmem [#allocation5], %s215
        %p217 = scmp.lt.s32.totalorder %s25, 0
        %s218 = scalar_select %p217, %s25, 0
        %s219 = smul.addr %s218, 8
        %s220 = scalar_lea.vmem %s1, %s219
        %s221 = smul.u32 2, %s24
        %s222 = smul.u32 2, %s24
        %v223 = vld [vmem:[%s190] sm:$0xff]
        %v224 = vld [vmem:[%s190 + $0x8] sm:$0xff]
        %v225 = vld [vmem:[%s220] sm:$0xff]
        %v226 = vld [vmem:[%s220 + $0x8] sm:$0xff]
        %vm227 = vcmask 130048
        %v229 = vsel %vm227, %v223, 0
        %v232 = vsel %vm227, %v224, 0
        %234 = vmatprep.subr.mxu0 0.0
        %235 = vmatpush1.msra.mxu0 0.0
        %236 = vmatprep.subr.mxu0 0.0
        %237 = vmatpush1.msra.mxu0 0.0
        %238 = vmatprep.subr.mxu0 0.0
        %239 = vmatpush1.msra.mxu0 0.0
        %240 = vmatprep.subr.mxu0 0.0
        %241 = vmatpush1.msra.mxu0 0.0
        %242 = vmatprep.subr.mxu0 0.0
        %243 = vmatpush1.msra.mxu0 0.0
        %244 = vmatprep.subr.mxu0 0.0
        %245 = vmatpush1.msra.mxu0 0.0
        %246 = vmatprep.subr.mxu0 0.0
        %247 = vmatpush1.msra.mxu0 0.0
        %248 = vmatprep.subr.mxu0 0.0
        %249 = vmatpush1.msra.mxu0 0.0
        %250 = vmatprep.subr.mxu0 0.0
        %251 = vmatpush1.msra.mxu0 0.0
        %252 = vmatprep.subr.mxu0 0.0
        %253 = vmatpush1.msra.mxu0 0.0
        %254 = vmatprep.subr.mxu0 0.0
        %255 = vmatpush1.msra.mxu0 0.0
        %256 = vmatprep.subr.mxu0 0.0
        %257 = vmatpush1.msra.mxu0 0.0
        %258 = vmatprep.subr.mxu0 0.0
        %259 = vmatpush1.msra.mxu0 0.0
        %260 = vmatprep.subr.mxu0 0.0
        %261 = vmatpush1.msra.mxu0 0.0
        %262 = vmatprep.subr.mxu0 0.0
        %263 = vmatpush1.msra.mxu0 %v226
        %264 = vmatprep.subr.mxu0 0.0
        %265 = vmatpush1.msra.mxu0 %v225
        %266 = vmatprep.subr.mxu0 0.0
        %267 = vmatpush2.msra.mxu0 0.0
        %268 = vmatprep.subr.mxu0 0.0
        %269 = vmatpush2.msra.mxu0 0.0
        %270 = vmatprep.subr.mxu0 0.0
        %271 = vmatpush2.msra.mxu0 0.0
        %272 = vmatprep.subr.mxu0 0.0
        %273 = vmatpush2.msra.mxu0 0.0
        %274 = vmatprep.subr.mxu0 0.0
        %275 = vmatpush2.msra.mxu0 0.0
        %276 = vmatprep.subr.mxu0 0.0
        %277 = vmatpush2.msra.mxu0 0.0
        %278 = vmatprep.subr.mxu0 0.0
        %279 = vmatpush2.msra.mxu0 0.0
        %280 = vmatprep.subr.mxu0 0.0
        %281 = vmatpush2.msra.mxu0 0.0
        %282 = vmatprep.subr.mxu0 0.0
        %283 = vmatpush2.msra.mxu0 0.0
        %284 = vmatprep.subr.mxu0 0.0
        %285 = vmatpush2.msra.mxu0 0.0
        %286 = vmatprep.subr.mxu0 0.0
        %287 = vmatpush2.msra.mxu0 0.0
        %288 = vmatprep.subr.mxu0 0.0
        %289 = vmatpush2.msra.mxu0 0.0
        %290 = vmatprep.subr.mxu0 0.0
        %291 = vmatpush2.msra.mxu0 0.0
        %292 = vmatprep.subr.mxu0 0.0
        %293 = vmatpush2.msra.mxu0 0.0
        %294 = vmatprep.subr.mxu0 0.0
        %295 = vmatpush2.msra.mxu0 0.0
        %296 = vmatprep.subr.mxu0 0.0
        %297 = vmatpush2.msra.mxu0 0.0
        %298 = vmatprep.mubr.f32.mxu0 0.0
        %299 = vmatmul.mubr.f32.gmra.mxu0 %v229
        %v300 = vpop.f32.mrf.mxu0
        %v301 = vadd.f32 0.0, %v300
        %v302 = vpop.f32.mrf.mxu0
        %303 = vmatprep.mubr.f32.mxu0 0.0
        %304 = vmatmul.mubr.f32.gmra.mxu0 %v232
        %v305 = vpop.f32.mrf.mxu0
        %v306 = vadd.f32 0.0, %v305
        %v307 = vpop.f32.mrf.mxu0
        %308 = vdwg.mxu0
        %v309 = vld [vmem:[%s0] sm:$0xff]
        %v310 = vld [vmem:[%s0 + $0x8] sm:$0xff]
        %v311 = vld [vmem:[%s0 + $0x10] sm:$0xff]
        %v312 = vld [vmem:[%s0 + $0x18] sm:$0xff]
        %v314 = vsel %vm227, %v309, 0
        %v317 = vsel %vm227, %v310, 0
        %v320 = vsel %vm227, %v311, 0
        %v323 = vsel %vm227, %v312, 0
        %325 = vmatprep.subr.mxu0 0.0
        %326 = vmatpush1.msra.mxu0 0.0
        %327 = vmatprep.subr.mxu0 0.0
        %328 = vmatpush1.msra.mxu0 0.0
        %329 = vmatprep.subr.mxu0 0.0
        %330 = vmatpush1.msra.mxu0 0.0
        %331 = vmatprep.subr.mxu0 0.0
        %332 = vmatpush1.msra.mxu0 0.0
        %333 = vmatprep.subr.mxu0 0.0
        %334 = vmatpush1.msra.mxu0 0.0
        %335 = vmatprep.subr.mxu0 0.0
        %336 = vmatpush1.msra.mxu0 0.0
        %337 = vmatprep.subr.mxu0 0.0
        %338 = vmatpush1.msra.mxu0 0.0
        %339 = vmatprep.subr.mxu0 0.0
        %340 = vmatpush1.msra.mxu0 0.0
        %341 = vmatprep.subr.mxu0 0.0
        %342 = vmatpush1.msra.mxu0 0.0
        %343 = vmatprep.subr.mxu0 0.0
        %344 = vmatpush1.msra.mxu0 0.0
        %345 = vmatprep.subr.mxu0 0.0
        %346 = vmatpush1.msra.mxu0 0.0
        %347 = vmatprep.subr.mxu0 0.0
        %348 = vmatpush1.msra.mxu0 0.0
        %349 = vmatprep.subr.mxu0 0.0
        %350 = vmatpush1.msra.mxu0 0.0
        %351 = vmatprep.subr.mxu0 0.0
        %352 = vmatpush1.msra.mxu0 0.0
        %353 = vmatprep.subr.mxu0 0.0
        %354 = vmatpush1.msra.mxu0 %v306
        %355 = vmatprep.subr.mxu0 0.0
        %356 = vmatpush1.msra.mxu0 %v301
        %357 = vmatprep.subr.mxu0 0.0
        %358 = vmatpush2.msra.mxu0 0.0
        %359 = vmatprep.subr.mxu0 0.0
        %360 = vmatpush2.msra.mxu0 0.0
        %361 = vmatprep.subr.mxu0 0.0
        %362 = vmatpush2.msra.mxu0 0.0
        %363 = vmatprep.subr.mxu0 0.0
        %364 = vmatpush2.msra.mxu0 0.0
        %365 = vmatprep.subr.mxu0 0.0
        %366 = vmatpush2.msra.mxu0 0.0
        %367 = vmatprep.subr.mxu0 0.0
        %368 = vmatpush2.msra.mxu0 0.0
        %369 = vmatprep.subr.mxu0 0.0
        %370 = vmatpush2.msra.mxu0 0.0
        %371 = vmatprep.subr.mxu0 0.0
        %372 = vmatpush2.msra.mxu0 0.0
        %373 = vmatprep.subr.mxu0 0.0
        %374 = vmatpush2.msra.mxu0 0.0
        %375 = vmatprep.subr.mxu0 0.0
        %376 = vmatpush2.msra.mxu0 0.0
        %377 = vmatprep.subr.mxu0 0.0
        %378 = vmatpush2.msra.mxu0 0.0
        %379 = vmatprep.subr.mxu0 0.0
        %380 = vmatpush2.msra.mxu0 0.0
        %381 = vmatprep.subr.mxu0 0.0
        %382 = vmatpush2.msra.mxu0 0.0
        %383 = vmatprep.subr.mxu0 0.0
        %384 = vmatpush2.msra.mxu0 0.0
        %385 = vmatprep.subr.mxu0 0.0
        %386 = vmatpush2.msra.mxu0 0.0
        %387 = vmatprep.subr.mxu0 0.0
        %388 = vmatpush2.msra.mxu0 0.0
        %389 = vmatprep.mubr.f32.mxu0 0.0
        %390 = vmatmul.mubr.f32.gmra.mxu0 %v314
        %v391 = vpop.f32.mrf.mxu0
        %v392 = vadd.f32 0.0, %v391
        %v393 = vpop.f32.mrf.mxu0
        %394 = vmatprep.mubr.f32.mxu0 0.0
        %395 = vmatmul.mubr.f32.gmra.mxu0 %v317
        %v396 = vpop.f32.mrf.mxu0
        %v397 = vadd.f32 0.0, %v396
        %v398 = vpop.f32.mrf.mxu0
        %399 = vmatprep.mubr.f32.mxu0 0.0
        %400 = vmatmul.mubr.f32.gmra.mxu0 %v320
        %v401 = vpop.f32.mrf.mxu0
        %v402 = vadd.f32 0.0, %v401
        %v403 = vpop.f32.mrf.mxu0
        %404 = vmatprep.mubr.f32.mxu0 0.0
        %405 = vmatmul.mubr.f32.gmra.mxu0 %v323
        %v406 = vpop.f32.mrf.mxu0
        %v407 = vadd.f32 0.0, %v406
        %v408 = vpop.f32.mrf.mxu0
        %409 = vdwg.mxu0
        %vm410 = vcmask 261120
        %411 = vst.msk [vmem:[%s216] sm:$0xff] %vm410, %v392
        %412 = vst.msk [vmem:[%s216 + $0x8] sm:$0xff] %vm410, %v397
        %413 = vst.msk [vmem:[%s216 + $0x10] sm:$0xff] %vm410, %v402
        %414 = vst.msk [vmem:[%s216 + $0x18] sm:$0xff] %vm410, %v407
        %s415 = scalar_lea.vmem %s190, 16 [#allocation2]
        %v416 = vld [vmem:[%s415] sm:$0xff]
        %v417 = vld [vmem:[%s415 + $0x8] sm:$0xff]
        %v418 = vld [vmem:[%s220] sm:$0xff]
        %v419 = vld [vmem:[%s220 + $0x8] sm:$0xff]
        %v421 = vsel %vm227, %v416, 0
        %v424 = vsel %vm227, %v417, 0
        %426 = vmatprep.subr.mxu0 0.0
        %427 = vmatpush1.msra.mxu0 0.0
        %428 = vmatprep.subr.mxu0 0.0
        %429 = vmatpush1.msra.mxu0 0.0
        %430 = vmatprep.subr.mxu0 0.0
        %431 = vmatpush1.msra.mxu0 0.0
        %432 = vmatprep.subr.mxu0 0.0
        %433 = vmatpush1.msra.mxu0 0.0
        %434 = vmatprep.subr.mxu0 0.0
        %435 = vmatpush1.msra.mxu0 0.0
        %436 = vmatprep.subr.mxu0 0.0
        %437 = vmatpush1.msra.mxu0 0.0
        %438 = vmatprep.subr.mxu0 0.0
        %439 = vmatpush1.msra.mxu0 0.0
        %440 = vmatprep.subr.mxu0 0.0
        %441 = vmatpush1.msra.mxu0 0.0
        %442 = vmatprep.subr.mxu0 0.0
        %443 = vmatpush1.msra.mxu0 0.0
        %444 = vmatprep.subr.mxu0 0.0
        %445 = vmatpush1.msra.mxu0 0.0
        %446 = vmatprep.subr.mxu0 0.0
        %447 = vmatpush1.msra.mxu0 0.0
        %448 = vmatprep.subr.mxu0 0.0
        %449 = vmatpush1.msra.mxu0 0.0
        %450 = vmatprep.subr.mxu0 0.0
        %451 = vmatpush1.msra.mxu0 0.0
        %452 = vmatprep.subr.mxu0 0.0
        %453 = vmatpush1.msra.mxu0 0.0
        %454 = vmatprep.subr.mxu0 0.0
        %455 = vmatpush1.msra.mxu0 %v419
        %456 = vmatprep.subr.mxu0 0.0
        %457 = vmatpush1.msra.mxu0 %v418
        %458 = vmatprep.subr.mxu0 0.0
        %459 = vmatpush2.msra.mxu0 0.0
        %460 = vmatprep.subr.mxu0 0.0
        %461 = vmatpush2.msra.mxu0 0.0
        %462 = vmatprep.subr.mxu0 0.0
        %463 = vmatpush2.msra.mxu0 0.0
        %464 = vmatprep.subr.mxu0 0.0
        %465 = vmatpush2.msra.mxu0 0.0
        %466 = vmatprep.subr.mxu0 0.0
        %467 = vmatpush2.msra.mxu0 0.0
        %468 = vmatprep.subr.mxu0 0.0
        %469 = vmatpush2.msra.mxu0 0.0
        %470 = vmatprep.subr.mxu0 0.0
        %471 = vmatpush2.msra.mxu0 0.0
        %472 = vmatprep.subr.mxu0 0.0
        %473 = vmatpush2.msra.mxu0 0.0
        %474 = vmatprep.subr.mxu0 0.0
        %475 = vmatpush2.msra.mxu0 0.0
        %476 = vmatprep.subr.mxu0 0.0
        %477 = vmatpush2.msra.mxu0 0.0
        %478 = vmatprep.subr.mxu0 0.0
        %479 = vmatpush2.msra.mxu0 0.0
        %480 = vmatprep.subr.mxu0 0.0
        %481 = vmatpush2.msra.mxu0 0.0
        %482 = vmatprep.subr.mxu0 0.0
        %483 = vmatpush2.msra.mxu0 0.0
        %484 = vmatprep.subr.mxu0 0.0
        %485 = vmatpush2.msra.mxu0 0.0
        %486 = vmatprep.subr.mxu0 0.0
        %487 = vmatpush2.msra.mxu0 0.0
        %488 = vmatprep.subr.mxu0 0.0
        %489 = vmatpush2.msra.mxu0 0.0
        %490 = vmatprep.mubr.f32.mxu0 0.0
        %491 = vmatmul.mubr.f32.gmra.mxu0 %v421
        %v492 = vpop.f32.mrf.mxu0
        %v493 = vadd.f32 0.0, %v492
        %v494 = vpop.f32.mrf.mxu0
        %495 = vmatprep.mubr.f32.mxu0 0.0
        %496 = vmatmul.mubr.f32.gmra.mxu0 %v424
        %v497 = vpop.f32.mrf.mxu0
        %v498 = vadd.f32 0.0, %v497
        %v499 = vpop.f32.mrf.mxu0
        %500 = vdwg.mxu0
        %v501 = vld [vmem:[%s0] sm:$0xff]
        %v502 = vld [vmem:[%s0 + $0x8] sm:$0xff]
        %v503 = vld [vmem:[%s0 + $0x10] sm:$0xff]
        %v504 = vld [vmem:[%s0 + $0x18] sm:$0xff]
        %v506 = vsel %vm227, %v501, 0
        %v509 = vsel %vm227, %v502, 0
        %v512 = vsel %vm227, %v503, 0
        %v515 = vsel %vm227, %v504, 0
        %517 = vmatprep.subr.mxu0 0.0
        %518 = vmatpush1.msra.mxu0 0.0
        %519 = vmatprep.subr.mxu0 0.0
        %520 = vmatpush1.msra.mxu0 0.0
        %521 = vmatprep.subr.mxu0 0.0
        %522 = vmatpush1.msra.mxu0 0.0
        %523 = vmatprep.subr.mxu0 0.0
        %524 = vmatpush1.msra.mxu0 0.0
        %525 = vmatprep.subr.mxu0 0.0
        %526 = vmatpush1.msra.mxu0 0.0
        %527 = vmatprep.subr.mxu0 0.0
        %528 = vmatpush1.msra.mxu0 0.0
        %529 = vmatprep.subr.mxu0 0.0
        %530 = vmatpush1.msra.mxu0 0.0
        %531 = vmatprep.subr.mxu0 0.0
        %532 = vmatpush1.msra.mxu0 0.0
        %533 = vmatprep.subr.mxu0 0.0
        %534 = vmatpush1.msra.mxu0 0.0
        %535 = vmatprep.subr.mxu0 0.0
        %536 = vmatpush1.msra.mxu0 0.0
        %537 = vmatprep.subr.mxu0 0.0
        %538 = vmatpush1.msra.mxu0 0.0
        %539 = vmatprep.subr.mxu0 0.0
        %540 = vmatpush1.msra.mxu0 0.0
        %541 = vmatprep.subr.mxu0 0.0
        %542 = vmatpush1.msra.mxu0 0.0
        %543 = vmatprep.subr.mxu0 0.0
        %544 = vmatpush1.msra.mxu0 0.0
        %545 = vmatprep.subr.mxu0 0.0
        %546 = vmatpush1.msra.mxu0 %v498
        %547 = vmatprep.subr.mxu0 0.0
        %548 = vmatpush1.msra.mxu0 %v493
        %549 = vmatprep.subr.mxu0 0.0
        %550 = vmatpush2.msra.mxu0 0.0
        %551 = vmatprep.subr.mxu0 0.0
        %552 = vmatpush2.msra.mxu0 0.0
        %553 = vmatprep.subr.mxu0 0.0
        %554 = vmatpush2.msra.mxu0 0.0
        %555 = vmatprep.subr.mxu0 0.0
        %556 = vmatpush2.msra.mxu0 0.0
        %557 = vmatprep.subr.mxu0 0.0
        %558 = vmatpush2.msra.mxu0 0.0
        %559 = vmatprep.subr.mxu0 0.0
        %560 = vmatpush2.msra.mxu0 0.0
        %561 = vmatprep.subr.mxu0 0.0
        %562 = vmatpush2.msra.mxu0 0.0
        %563 = vmatprep.subr.mxu0 0.0
        %564 = vmatpush2.msra.mxu0 0.0
        %565 = vmatprep.subr.mxu0 0.0
        %566 = vmatpush2.msra.mxu0 0.0
        %567 = vmatprep.subr.mxu0 0.0
        %568 = vmatpush2.msra.mxu0 0.0
        %569 = vmatprep.subr.mxu0 0.0
        %570 = vmatpush2.msra.mxu0 0.0
        %571 = vmatprep.subr.mxu0 0.0
        %572 = vmatpush2.msra.mxu0 0.0
        %573 = vmatprep.subr.mxu0 0.0
        %574 = vmatpush2.msra.mxu0 0.0
        %575 = vmatprep.subr.mxu0 0.0
        %576 = vmatpush2.msra.mxu0 0.0
        %577 = vmatprep.subr.mxu0 0.0
        %578 = vmatpush2.msra.mxu0 0.0
        %579 = vmatprep.subr.mxu0 0.0
        %580 = vmatpush2.msra.mxu0 0.0
        %581 = vmatprep.mubr.f32.mxu0 0.0
        %582 = vmatmul.mubr.f32.gmra.mxu0 %v506
        %v583 = vpop.f32.mrf.mxu0
        %v584 = vadd.f32 0.0, %v583
        %v585 = vpop.f32.mrf.mxu0
        %586 = vmatprep.mubr.f32.mxu0 0.0
        %587 = vmatmul.mubr.f32.gmra.mxu0 %v509
        %v588 = vpop.f32.mrf.mxu0
        %v589 = vadd.f32 0.0, %v588
        %v590 = vpop.f32.mrf.mxu0
        %591 = vmatprep.mubr.f32.mxu0 0.0
        %592 = vmatmul.mubr.f32.gmra.mxu0 %v512
        %v593 = vpop.f32.mrf.mxu0
        %v594 = vadd.f32 0.0, %v593
        %v595 = vpop.f32.mrf.mxu0
        %596 = vmatprep.mubr.f32.mxu0 0.0
        %597 = vmatmul.mubr.f32.gmra.mxu0 %v515
        %v598 = vpop.f32.mrf.mxu0
        %v599 = vadd.f32 0.0, %v598
        %v600 = vpop.f32.mrf.mxu0
        %601 = vdwg.mxu0
        %s602 = scalar_lea.vmem %s216, 32 [#allocation5]
        %603 = vst.msk [vmem:[%s602] sm:$0xff] %vm410, %v584
        %604 = vst.msk [vmem:[%s602 + $0x8] sm:$0xff] %vm410, %v589
        %605 = vst.msk [vmem:[%s602 + $0x10] sm:$0xff] %vm410, %v594
        %606 = vst.msk [vmem:[%s602 + $0x18] sm:$0xff] %vm410, %v599
        %s607 = sand.u32 %s115, 1
        %s608 = scalar_lea.sflag [#allocation4], %s607
        %s609 = sand.u32 %s115, 1
        %s610 = smul.addr %s609, 64
        %s611 = scalar_lea.vmem [#allocation5], %s610
        // Predicated region
        $region37: #{tpu_custom_call.1} parent=31 // pred_check
          %p612 = pneg %p125
        $region38: #{tpu_custom_call.1} parent=31 // pred_check_branch
          %614 = sbr.rel (%p612) target = $region40
        $region39: #{tpu_custom_call.1} parent=31 // pred_region
          %s615 = smul.u32 2, %s24
          %s617 = ssub.s32 1024, 1024
          %618 = vsyncadd %s608, %s617
          %s619 = smul.addr %s615, 4
          %s620 = sadd.s32 %s25, %s619
          %s621 = smul.addr %s620, 128
          %s622 = scalar_lea.hbm %s3, %s621
          %s623 = sshll.u32 %s611, 4
          %s624 = int_to_ptr.vmem [resolvable:$true] %s623
          %629 = dma.vmem_to_hbm [thread:$0]  %s624, 1024, %s622, %s608, 128, 128, 8
        $region40: #{tpu_custom_call.1} parent=31 // pred_fallthru
          _
      $region32: #{tpu_custom_call.1} parent=5 // pred_fallthru
        _
      %p630 = scmp.le.s32.totalorder 2, %s15
      // Predicated region
      $region41: #{tpu_custom_call.1} parent=5 // pred_check
        %p631 = pneg %p630
      $region42: #{tpu_custom_call.1} parent=5 // pred_check_branch
        %633 = sbr.rel (%p631) target = $region44
      $region43: #{tpu_custom_call.1} parent=5 // pred_region
        %s634 = ssub.s32 %s15, 2
        // Predicated region
        $region45: #{tpu_custom_call.1} parent=43 // pred_check
          %p635 = pneg %p131
        $region46: #{tpu_custom_call.1} parent=43 // pred_check_branch
          %637 = sbr.rel (%p635) target = $region48
        $region47: #{tpu_custom_call.1} parent=43 // pred_region
          %s638 = sand.u32 %s116, 1
          %s639 = scalar_lea.sflag [#allocation4], %s638
          %s640 = sand.u32 %s116, 1
          %s641 = smul.addr %s640, 64
          %s642 = scalar_lea.vmem [#allocation5], %s641
          %643 = dma.done %s639, 1024
        $region48: #{tpu_custom_call.1} parent=43 // pred_fallthru
          _
      $region44: #{tpu_custom_call.1} parent=5 // pred_fallthru
        _
    $region6: #{tpu_custom_call.1} parent=1 // loop_footer
      %s19 = sadd.s32 1, %s15
    $region7: #{tpu_custom_call.1} parent=1 // loop_footer_branch
      %14 = sbr.rel target = $region3
    $region8: #{tpu_custom_call.1} parent=1 // loop_exit
      _
    %644 = vsyncpa [#allocation3], 1
    %s645 = scalar_lea.sflag [#allocation3], 1
    %646 = vsyncpa %s645, 1
    %647 = vsyncpa [#allocation4], 1
    %s648 = scalar_lea.sflag [#allocation4], 1
    %649 = vsyncpa %s648, 1

</llo_original>
